<compile_context>
chip_gen: v6e
topology: v6e:2x2x1
jax: 0.10.0
libtpu: 0.0.40
codegen_flags: <defaults>
</compile_context>

<pallas_src>
import functools
import math

import jax
import jax.numpy as jnp
from jax.experimental import pallas as pl
from jax.experimental.pallas import tpu as pltpu


def _decoder_kernel(num_layers, hidden_dim, fuse_xh, mm_dtype, *refs):
    """Fused decoder step: L LSTM layers + fc projection.

    refs layout (inputs, then outputs):
      x (B,1) f32, h0 (L,B,H) f32, c0 (L,B,H) f32,
      w_ih0_t (1,4H) f32, w_hh0_t (H,4H) mm_dtype, b0 (1,4H) f32,
      w_fc_t (H,V) mm_dtype, b_fc (1,V) f32,
      per layer l in 1..L-1:
        fused:   w_fused_l (2H,4H) mm_dtype, b_l (1,4H) f32
        unfused: w_ih_l (H,4H), w_hh_l (H,4H) mm_dtype, b_l (1,4H) f32
      outputs: logits (B,V) f32, h_out (L,B,H) f32, c_out (L,B,H) f32

    Gate columns are pre-reordered to (i, f, o, g).
    """
    H = hidden_dim
    per_layer = 2 if fuse_xh else 3
    n_extra = per_layer * (num_layers - 1)
    (x_ref, h0_ref, c0_ref,
     w_ih0_ref, w_hh0_ref, b0_ref,
     w_fc_ref, b_fc_ref) = refs[:8]
    extra = refs[8:8 + n_extra]
    logits_ref, h_out_ref, c_out_ref = refs[8 + n_extra:]

    def lstm_gates(gates, c_prev):
        # Gate order (i, f, o, g): one sigmoid pass over a contiguous 3H slice
        # and one tanh pass over the last H slice (halves EUP work vs applying
        # both activations to the whole (B, 4H) block).
        sig = jax.nn.sigmoid(gates[:, :3 * H])
        g_g = jnp.tanh(gates[:, 3 * H:])
        i_g = sig[:, 0 * H:1 * H]
        f_g = sig[:, 1 * H:2 * H]
        o_g = sig[:, 2 * H:3 * H]
        c_new = f_g * c_prev + i_g * g_g
        h_new = o_g * jnp.tanh(c_new)
        return h_new, c_new

    # ---- layer 0: input dim is 1 -> VPU broadcast multiply (f32) + one MXU
    # recurrent matmul (bf16 operands, f32 accumulation) ----
    x = x_ref[...]                                                 # (B, 1) f32
    h_prev = h0_ref[0]
    c_prev = c0_ref[0]
    gates = (x * w_ih0_ref[...]
             + jnp.dot(h_prev.astype(mm_dtype), w_hh0_ref[...],
                       preferred_element_type=jnp.float32)
             + b0_ref[...])
    h_new, c_new = lstm_gates(gates, c_prev)
    h_out_ref[0] = h_new
    c_out_ref[0] = c_new
    layer_in = h_new

    # ---- layers 1..L-1 ----
    for l in range(1, num_layers):
        h_prev = h0_ref[l]
        c_prev = c0_ref[l]
        if fuse_xh:
            # H % 128 == 0: the lane-dim concat lands on a vreg boundary, so a
            # single fused [x, h] @ [W_ih^T ; W_hh^T] matmul is free of
            # relayout copies.
            w_ref, b_ref = extra[2 * (l - 1):2 * l]
            xh = jnp.concatenate([layer_in, h_prev], axis=1).astype(mm_dtype)
            gates = (jnp.dot(xh, w_ref[...],
                             preferred_element_type=jnp.float32)
                     + b_ref[...])
        else:
            # Non-128-aligned H: two dots avoid the lane-shift relayout that a
            # concat at a non-128 boundary would force (MXU cost unchanged,
            # these matmuls are K-starved).
            w_ih_ref, w_hh_ref, b_ref = extra[3 * (l - 1):3 * l]
            gates = (jnp.dot(layer_in.astype(mm_dtype), w_ih_ref[...],
                             preferred_element_type=jnp.float32)
                     + jnp.dot(h_prev.astype(mm_dtype), w_hh_ref[...],
                               preferred_element_type=jnp.float32)
                     + b_ref[...])
        h_new, c_new = lstm_gates(gates, c_prev)
        h_out_ref[l] = h_new
        c_out_ref[l] = c_new
        layer_in = h_new

    # ---- fc_out projection ----
    logits_ref[...] = (jnp.dot(layer_in.astype(mm_dtype), w_fc_ref[...],
                               preferred_element_type=jnp.float32)
                       + b_fc_ref[...])


class Decoder:
    """JAX/Pallas port of the PyTorch Decoder (Embedding + LSTM + Linear)."""

    def __init__(self, hidden_dim, output_dim, num_layers=1, dropout=0.1,
                 matmul_dtype=jnp.bfloat16, key=None):
        self.hidden_dim = hidden_dim
        self.output_dim = output_dim
        self.num_layers = num_layers
        self.dropout = dropout      # defined in the torch module, unused in forward()
        self._mm_dtype = matmul_dtype
        self._fuse_xh = (hidden_dim % 128 == 0)

        if key is None:
            key = jax.random.PRNGKey(42)
        H, V = hidden_dim, output_dim
        k = 1.0 / math.sqrt(H)

        key, ke = jax.random.split(key)
        # nn.Embedding(output_dim, 1) default init ~ N(0, 1)
        self.embedding = jax.random.normal(ke, (V, 1), jnp.float32)

        # nn.LSTM parameters, PyTorch layout / gate order (i, f, g, o)
        self.lstm_params = []
        for layer in range(num_layers):
            in_d = 1 if layer == 0 else H
            key, k1, k2, k3, k4 = jax.random.split(key, 5)
            w_ih = jax.random.uniform(k1, (4 * H, in_d), jnp.float32, -k, k)
            w_hh = jax.random.uniform(k2, (4 * H, H), jnp.float32, -k, k)
            b_ih = jax.random.uniform(k3, (4 * H,), jnp.float32, -k, k)
            b_hh = jax.random.uniform(k4, (4 * H,), jnp.float32, -k, k)
            self.lstm_params.append((w_ih, w_hh, b_ih, b_hh))

        key, k5, k6 = jax.random.split(key, 3)
        self.w_fc = jax.random.uniform(k5, (V, H), jnp.float32, -k, k)
        self.b_fc = jax.random.uniform(k6, (V,), jnp.float32, -k, k)

        # ---- precompute transposed / gate-reordered / bf16 kernel weights ----
        def reorder(w_t):
            # columns (i, f, g, o) -> (i, f, o, g) along the last axis
            return jnp.concatenate(
                [w_t[..., :2 * H], w_t[..., 3 * H:4 * H], w_t[..., 2 * H:3 * H]],
                axis=-1)

        w_ih0, w_hh0, b_ih0, b_hh0 = self.lstm_params[0]
        # layer-0 input weights stay f32: they feed a VPU broadcast multiply.
        self._w_ih0_t = reorder(jnp.transpose(w_ih0))                   # (1, 4H)
        self._w_hh0_t = reorder(jnp.transpose(w_hh0)).astype(matmul_dtype)  # (H, 4H)
        self._b0 = reorder((b_ih0 + b_hh0)[None, :])                    # (1, 4H)

        self._extra = []
        for layer in range(1, num_layers):
            w_ih, w_hh, b_ih, b_hh = self.lstm_params[layer]
            w_ih_t = reorder(jnp.transpose(w_ih)).astype(matmul_dtype)  # (H, 4H)
            w_hh_t = reorder(jnp.transpose(w_hh)).astype(matmul_dtype)  # (H, 4H)
            b = reorder((b_ih + b_hh)[None, :])                         # (1, 4H)
            if self._fuse_xh:
                self._extra.append(
                    (jnp.concatenate([w_ih_t, w_hh_t], axis=0), b))     # (2H, 4H)
            else:
                self._extra.append((w_ih_t, w_hh_t, b))

        self._w_fc_t = jnp.transpose(self.w_fc).astype(matmul_dtype)    # (H, V)
        self._b_fc = self.b_fc[None, :]                                 # (1, V)

        # Explicit scoped-VMEM budget (v5e default is only 16 MiB); 32 MiB is
        # within the physical/default budget on v5e/v6e/v7x and is far above
        # what this fully-resident single-step kernel needs at small/medium H.
        self._vmem_limit_bytes = 32 * 1024 * 1024

    def __call__(self, input_ids, hidden):
        """input_ids: (B,) or (B, 1) integer tokens.
        hidden: (h, c), each (num_layers, B, hidden_dim).
        Returns (logits (B, output_dim), (h_new, c_new))."""
        H, V, L = self.hidden_dim, self.output_dim, self.num_layers
        h0, c0 = hidden

        ids = jnp.asarray(input_ids).astype(jnp.int32).reshape(-1)      # (B,)
        B = ids.shape[0]
        # Embedding dim is 1 -> trivial wrapper-side gather (removes the
        # in-kernel one-hot VPU multiply + XLU lane reduction).
        x = jnp.take(self.embedding, ids, axis=0)                       # (B, 1) f32
        h0 = jnp.asarray(h0, jnp.float32)                               # (L, B, H)
        c0 = jnp.asarray(c0, jnp.float32)                               # (L, B, H)

        in_arrays = [x, h0, c0, self._w_ih0_t, self._w_hh0_t, self._b0,
                     self._w_fc_t, self._b_fc]
        for params in self._extra:
            in_arrays += list(params)

        # Whole-array VMEM blocks, no grid: one un-pipelined invocation, no
        # wrapper-side padding and no post-call slicing, no double-buffering
        # of the constant weights.
        vmem = pltpu.MemorySpace.VMEM
        in_specs = [pl.BlockSpec(memory_space=vmem) for _ in in_arrays]
        out_specs = (pl.BlockSpec(memory_space=vmem),
                     pl.BlockSpec(memory_space=vmem),
                     pl.BlockSpec(memory_space=vmem))
        out_shape = (jax.ShapeDtypeStruct((B, V), jnp.float32),
                     jax.ShapeDtypeStruct((L, B, H), jnp.float32),
                     jax.ShapeDtypeStruct((L, B, H), jnp.float32))

        kernel = functools.partial(_decoder_kernel, L, H, self._fuse_xh,
                                   self._mm_dtype)
        logits, h_out, c_out = pl.pallas_call(
            kernel,
            in_specs=in_specs,
            out_specs=out_specs,
            out_shape=out_shape,
            compiler_params=pltpu.CompilerParams(
                vmem_limit_bytes=self._vmem_limit_bytes),
        )(*in_arrays)

        # Note: to use both v7x TensorCores or fill more MXU rows, batch
        # multiple independent decode streams into one call (B up to ~256 rows
        # is essentially free on the MXU) -- a call-site decision.
        return logits, (h_out, c_out)


def _reference_decoder(dec, input_ids, hidden):
    """Pure-JAX reference matching torch.nn semantics, for correctness check."""
    ids = jnp.asarray(input_ids).astype(jnp.int32).reshape(-1)
    x = dec.embedding[ids]                       # (B, 1)
    h0, c0 = hidden
    H = dec.hidden_dim
    hs, cs = [], []
    layer_in = x
    for l, (w_ih, w_hh, b_ih, b_hh) in enumerate(dec.lstm_params):
        g = layer_in @ w_ih.T + h0[l] @ w_hh.T + b_ih + b_hh
        i = jax.nn.sigmoid(g[:, :H])
        f = jax.nn.sigmoid(g[:, H:2 * H])
        gg = jnp.tanh(g[:, 2 * H:3 * H])
        o = jax.nn.sigmoid(g[:, 3 * H:])
        c_new = f * c0[l] + i * gg
        h_new = o * jnp.tanh(c_new)
        hs.append(h_new)
        cs.append(c_new)
        layer_in = h_new
    logits = layer_in @ dec.w_fc.T + dec.b_fc
    return logits, (jnp.stack(hs, 0), jnp.stack(cs, 0))


if __name__ == "__main__":
    B = 2
    HIDDEN_DIM = 32
    OUTPUT_DIM = 40          # phoneme vocabulary size
    NUM_LAYERS = 1

    key = jax.random.PRNGKey(0)
    k_ids, k_h, k_c, k_ids2, k_h2, k_c2 = jax.random.split(key, 6)

    input_ids = jax.random.randint(k_ids, (B, 1), 0, OUTPUT_DIM)
    h0 = jax.random.normal(k_h, (NUM_LAYERS, B, HIDDEN_DIM), jnp.float32)
    c0 = jax.random.normal(k_c, (NUM_LAYERS, B, HIDDEN_DIM), jnp.float32)

    # ---- default (bf16 matmul operands, f32 accumulation / gate math) ----
    dec = Decoder(HIDDEN_DIM, OUTPUT_DIM, num_layers=NUM_LAYERS, dropout=0.1,
                  key=jax.random.PRNGKey(1))
    logits, (h_out, c_out) = dec(input_ids, (h0, c0))
    jax.block_until_ready((logits, h_out, c_out))

    ref_logits, (ref_h, ref_c) = _reference_decoder(dec, input_ids, (h0, c0))
    assert logits.shape == (B, OUTPUT_DIM)
    assert h_out.shape == (NUM_LAYERS, B, HIDDEN_DIM)
    assert c_out.shape == (NUM_LAYERS, B, HIDDEN_DIM)
    TOL_BF16 = 5e-2          # bf16 matmul operands vs f32 reference
    assert jnp.allclose(logits, ref_logits, atol=TOL_BF16, rtol=TOL_BF16)
    assert jnp.allclose(h_out, ref_h, atol=TOL_BF16, rtol=TOL_BF16)
    assert jnp.allclose(c_out, ref_c, atol=TOL_BF16, rtol=TOL_BF16)

    # ---- stacked layers (two-dot path for H % 128 != 0), bf16 default ----
    dec2 = Decoder(HIDDEN_DIM, OUTPUT_DIM, num_layers=2, dropout=0.1,
                   key=jax.random.PRNGKey(2))
    ids2 = jax.random.randint(k_ids2, (B, 1), 0, OUTPUT_DIM)
    h0_2 = jax.random.normal(k_h2, (2, B, HIDDEN_DIM), jnp.float32)
    c0_2 = jax.random.normal(k_c2, (2, B, HIDDEN_DIM), jnp.float32)
    logits2, (h2, c2) = dec2(ids2, (h0_2, c0_2))
    jax.block_until_ready((logits2, h2, c2))
    r_logits2, (r_h2, r_c2) = _reference_decoder(dec2, ids2, (h0_2, c0_2))
    assert jnp.allclose(logits2, r_logits2, atol=TOL_BF16, rtol=TOL_BF16)
    assert jnp.allclose(h2, r_h2, atol=TOL_BF16, rtol=TOL_BF16)
    assert jnp.allclose(c2, r_c2, atol=TOL_BF16, rtol=TOL_BF16)

    # ---- exact-parity check: f32 matmul operands, tight tolerance ----
    dec3 = Decoder(HIDDEN_DIM, OUTPUT_DIM, num_layers=2, dropout=0.1,
                   matmul_dtype=jnp.float32, key=jax.random.PRNGKey(2))
    logits3, (h3, c3) = dec3(ids2, (h0_2, c0_2))
    jax.block_until_ready((logits3, h3, c3))
    r_logits3, (r_h3, r_c3) = _reference_decoder(dec3, ids2, (h0_2, c0_2))
    assert jnp.allclose(logits3, r_logits3, atol=1e-4, rtol=1e-4)
    assert jnp.allclose(h3, r_h3, atol=1e-4, rtol=1e-4)
    assert jnp.allclose(c3, r_c3, atol=1e-4, rtol=1e-4)

    print("KERNEL_OK")
</pallas_src>

<mosaic_0001>
module attributes {stable_mosaic.version = 11 : i64} {
  func.func @_decoder_kernel(%arg0: memref<2x1xf32, #tpu.memory_space<vmem>>, %arg1: memref<1x2x32xf32, #tpu.memory_space<vmem>>, %arg2: memref<1x2x32xf32, #tpu.memory_space<vmem>>, %arg3: memref<1x128xf32, #tpu.memory_space<vmem>>, %arg4: memref<32x128xbf16, #tpu.memory_space<vmem>>, %arg5: memref<1x128xf32, #tpu.memory_space<vmem>>, %arg6: memref<32x40xbf16, #tpu.memory_space<vmem>>, %arg7: memref<1x40xf32, #tpu.memory_space<vmem>>, %arg8: memref<2x40xf32, #tpu.memory_space<vmem>>, %arg9: memref<1x2x32xf32, #tpu.memory_space<vmem>>, %arg10: memref<1x2x32xf32, #tpu.memory_space<vmem>>) attributes {dimension_semantics = [], scalar_prefetch = 0 : i64, scratch_operands = 0 : i64, tpu.core_type = #tpu.core_type<tc>} {
    %c0 = arith.constant 0 : index
    %c0_0 = arith.constant 0 : index
    %0 = vector.load %arg0[%c0, %c0_0] : memref<2x1xf32, #tpu.memory_space<vmem>>, vector<2x1xf32>
    %c0_1 = arith.constant 0 : index
    %c0_2 = arith.constant 0 : index
    %c0_3 = arith.constant 0 : index
    %1 = vector.load %arg1[%c0_1, %c0_2, %c0_3] : memref<1x2x32xf32, #tpu.memory_space<vmem>>, vector<1x2x32xf32>
    %2 = vector.shape_cast %1 : vector<1x2x32xf32> to vector<2x32xf32>
    %c0_4 = arith.constant 0 : index
    %c0_5 = arith.constant 0 : index
    %c0_6 = arith.constant 0 : index
    %3 = vector.load %arg2[%c0_4, %c0_5, %c0_6] : memref<1x2x32xf32, #tpu.memory_space<vmem>>, vector<1x2x32xf32>
    %4 = vector.shape_cast %3 : vector<1x2x32xf32> to vector<2x32xf32>
    %c0_7 = arith.constant 0 : index
    %c0_8 = arith.constant 0 : index
    %5 = vector.load %arg3[%c0_7, %c0_8] : memref<1x128xf32, #tpu.memory_space<vmem>>, vector<1x128xf32>
    %6 = vector.broadcast %0 : vector<2x1xf32> to vector<2x128xf32>
    %7 = vector.broadcast %5 : vector<1x128xf32> to vector<2x128xf32>
    %8 = arith.mulf %6, %7 : vector<2x128xf32>
    %9 = arith.truncf %2 : vector<2x32xf32> to vector<2x32xbf16>
    %c0_9 = arith.constant 0 : index
    %c0_10 = arith.constant 0 : index
    %10 = vector.load %arg4[%c0_9, %c0_10] : memref<32x128xbf16, #tpu.memory_space<vmem>>, vector<32x128xbf16>
    %cst = arith.constant dense<0.000000e+00> : vector<2x128xf32>
    %11 = tpu.matmul %9, %10, %cst {dimension_numbers = #tpu.dot_dimension_numbers<[1], [0], [0], [1], [0, 0, 1, 1], [], []>} : vector<2x32xbf16>, vector<32x128xbf16>, vector<2x128xf32> -> vector<2x128xf32>
    %12 = arith.addf %8, %11 : vector<2x128xf32>
    %c0_11 = arith.constant 0 : index
    %c0_12 = arith.constant 0 : index
    %13 = vector.load %arg5[%c0_11, %c0_12] : memref<1x128xf32, #tpu.memory_space<vmem>>, vector<1x128xf32>
    %14 = vector.broadcast %13 : vector<1x128xf32> to vector<2x128xf32>
    %15 = arith.addf %12, %14 : vector<2x128xf32>
    %16 = vector.extract_strided_slice %15 {offsets = [0, 0], sizes = [2, 96], strides = [1, 1]} : vector<2x128xf32> to vector<2x96xf32>
    %17 = arith.negf %16 : vector<2x96xf32>
    %18 = math.exp %17 : vector<2x96xf32>
    %cst_13 = arith.constant 1.000000e+00 : f32
    %19 = vector.broadcast %cst_13 : f32 to vector<2x96xf32>
    %20 = arith.addf %19, %18 : vector<2x96xf32>
    %21 = arith.divf %19, %20 : vector<2x96xf32>
    %22 = vector.extract_strided_slice %15 {offsets = [0, 96], sizes = [2, 32], strides = [1, 1]} : vector<2x128xf32> to vector<2x32xf32>
    %23 = math.tanh %22 : vector<2x32xf32>
    %24 = vector.extract_strided_slice %21 {offsets = [0, 0], sizes = [2, 32], strides = [1, 1]} : vector<2x96xf32> to vector<2x32xf32>
    %25 = vector.extract_strided_slice %21 {offsets = [0, 32], sizes = [2, 32], strides = [1, 1]} : vector<2x96xf32> to vector<2x32xf32>
    %26 = vector.extract_strided_slice %21 {offsets = [0, 64], sizes = [2, 32], strides = [1, 1]} : vector<2x96xf32> to vector<2x32xf32>
    %27 = arith.mulf %25, %4 : vector<2x32xf32>
    %28 = arith.mulf %24, %23 : vector<2x32xf32>
    %29 = arith.addf %27, %28 : vector<2x32xf32>
    %30 = math.tanh %29 : vector<2x32xf32>
    %31 = arith.mulf %26, %30 : vector<2x32xf32>
    %c0_14 = arith.constant 0 : index
    %c0_15 = arith.constant 0 : index
    %c0_16 = arith.constant 0 : index
    %32 = vector.load %arg9[%c0_14, %c0_15, %c0_16] : memref<1x2x32xf32, #tpu.memory_space<vmem>>, vector<1x2x32xf32>
    %33 = vector.shape_cast %32 : vector<1x2x32xf32> to vector<2x32xf32>
    %34 = vector.shape_cast %31 : vector<2x32xf32> to vector<1x2x32xf32>
    tpu.vector_store %arg9[%c0_14, %c0_15, %c0_16], %34 {strides = array<i32>} : memref<1x2x32xf32, #tpu.memory_space<vmem>>, vector<1x2x32xf32>,
    %c0_17 = arith.constant 0 : index
    %c0_18 = arith.constant 0 : index
    %c0_19 = arith.constant 0 : index
    %35 = vector.load %arg10[%c0_17, %c0_18, %c0_19] : memref<1x2x32xf32, #tpu.memory_space<vmem>>, vector<1x2x32xf32>
    %36 = vector.shape_cast %35 : vector<1x2x32xf32> to vector<2x32xf32>
    %37 = vector.shape_cast %29 : vector<2x32xf32> to vector<1x2x32xf32>
    tpu.vector_store %arg10[%c0_17, %c0_18, %c0_19], %37 {strides = array<i32>} : memref<1x2x32xf32, #tpu.memory_space<vmem>>, vector<1x2x32xf32>,
    %38 = arith.truncf %31 : vector<2x32xf32> to vector<2x32xbf16>
    %c0_20 = arith.constant 0 : index
    %c0_21 = arith.constant 0 : index
    %39 = vector.load %arg6[%c0_20, %c0_21] : memref<32x40xbf16, #tpu.memory_space<vmem>>, vector<32x40xbf16>
    %cst_22 = arith.constant dense<0.000000e+00> : vector<2x40xf32>
    %40 = tpu.matmul %38, %39, %cst_22 {dimension_numbers = #tpu.dot_dimension_numbers<[1], [0], [0], [1], [0, 0, 1, 1], [], []>} : vector<2x32xbf16>, vector<32x40xbf16>, vector<2x40xf32> -> vector<2x40xf32>
    %c0_23 = arith.constant 0 : index
    %c0_24 = arith.constant 0 : index
    %41 = vector.load %arg7[%c0_23, %c0_24] : memref<1x40xf32, #tpu.memory_space<vmem>>, vector<1x40xf32>
    %42 = vector.broadcast %41 : vector<1x40xf32> to vector<2x40xf32>
    %43 = arith.addf %40, %42 : vector<2x40xf32>
    %c0_25 = arith.constant 0 : index
    %c0_26 = arith.constant 0 : index
    %44 = vector.load %arg8[%c0_25, %c0_26] : memref<2x40xf32, #tpu.memory_space<vmem>>, vector<2x40xf32>
    tpu.vector_store %arg8[%c0_25, %c0_26], %43 {strides = array<i32>} : memref<2x40xf32, #tpu.memory_space<vmem>>, vector<2x40xf32>,
    return
  }
}

</mosaic_0001>

<llo_original>
// kernel: tpu_custom_call.1
$region0: #{tpu_custom_call.1}
  #allocation0 [shape = 'u32[]', space=smem, size = 0x4, offset = 0x4, fixed_abs, tag = 'smem constant byte address 0x4 - core index']
  #allocation1 [shape = 'u32[144,128]{1,0:T(1,128)}', space=vmem, size = 0x12000, scoped, tag = 'internal scratch']
  %s0 = inlined_call_operand.vmem [shape: f32[2,1], index: 0, kind: input, shape index: {}]
  %s1 = inlined_call_operand.vmem [shape: f32[1,2,32], index: 1, kind: input, shape index: {}]
  %s2 = inlined_call_operand.vmem [shape: f32[1,2,32], index: 2, kind: input, shape index: {}]
  %s3 = inlined_call_operand.vmem [shape: f32[1,128], index: 3, kind: input, shape index: {}]
  %s4 = inlined_call_operand.hbm [shape: bf16[32,128], index: 4, kind: input, shape index: {}]
  %s5 = inlined_call_operand.vmem [shape: f32[1,128], index: 5, kind: input, shape index: {}]
  %s6 = inlined_call_operand.hbm [shape: bf16[32,40], index: 6, kind: input, shape index: {}]
  %s7 = inlined_call_operand.vmem [shape: f32[1,40], index: 7, kind: input, shape index: {}]
  %s8 = inlined_call_operand.hbm [shape: f32[2,40], index: 8, kind: output, shape index: {0}]
  %s9 = inlined_call_operand.hbm [shape: f32[1,2,32], index: 9, kind: output, shape index: {1}]
  %s10 = inlined_call_operand.hbm [shape: f32[1,2,32], index: 10, kind: output, shape index: {2}]
  %11 = xla_tuple %s8, %s9, %s10
  %s12 = sld [smem:[#allocation0]]
  $region66: #{tpu_custom_call.1} parent=0
    _
  %s14 = ssub.s32 1, %s12
  %s15 = scalar_select 0, %s14, %s12
  $region1: #{tpu_custom_call.1} parent=0
    #allocation2 [shape = 'u8[8192]{0}', space=vmem, size = 0x2000, scoped, tag = 'input window, operand 4, single buffered']
    #allocation3 [shape = 's32[1]{0}', space=sflag, size = 0x4, scoped, tag = 'scoped memory for tpu_custom_call.1']
    #allocation4 [shape = 's32[1]{0}', space=sflag, size = 0x4, scoped, tag = 'scoped memory for tpu_custom_call.1']
    #allocation5 [shape = 'u8[8192]{0}', space=vmem, size = 0x2000, scoped, tag = 'input window, operand 6, single buffered']
    #allocation6 [shape = 's32[1]{0}', space=sflag, size = 0x4, scoped, tag = 'scoped memory for tpu_custom_call.1']
    #allocation7 [shape = 'u8[1024]{0}', space=vmem, size = 0x400, scoped, tag = 'output window, operand 0, single buffered']
    #allocation8 [shape = 'u8[1024]{0}', space=vmem, size = 0x400, scoped, tag = 'output window, operand 1, single buffered']
    #allocation9 [shape = 's32[1]{0}', space=sflag, size = 0x4, scoped, tag = 'scoped memory for tpu_custom_call.1']
    #allocation10 [shape = 'u8[1024]{0}', space=vmem, size = 0x400, scoped, tag = 'output window, operand 2, single buffered']
    %16 = vsyncpa [#allocation3], 0
    %17 = vsyncpa [#allocation6], 0
    %18 = vsyncpa [#allocation4], 0
    %19 = vsyncpa [#allocation9], 0
    // Predicated region
    $region2: #{tpu_custom_call.1} parent=1 // pred_check
      _
    $region3: #{tpu_custom_call.1} parent=1 // pred_check_branch
      %21 = sbr.rel (0) target = $region5
    $region4: #{tpu_custom_call.1} parent=1 // pred_region
      _
    $region5: #{tpu_custom_call.1} parent=1 // pred_fallthru
      _
    // Predicated region
    $region6: #{tpu_custom_call.1} parent=1 // pred_check
      _
    $region7: #{tpu_custom_call.1} parent=1 // pred_check_branch
      %23 = sbr.rel (0) target = $region9
    $region8: #{tpu_custom_call.1} parent=1 // pred_region
      _
    $region9: #{tpu_custom_call.1} parent=1 // pred_fallthru
      _
    // Predicated region
    $region10: #{tpu_custom_call.1} parent=1 // pred_check
      _
    $region11: #{tpu_custom_call.1} parent=1 // pred_check_branch
      %25 = sbr.rel (0) target = $region13
    $region12: #{tpu_custom_call.1} parent=1 // pred_region
      _
    $region13: #{tpu_custom_call.1} parent=1 // pred_fallthru
      _
    // Predicated region
    $region14: #{tpu_custom_call.1} parent=1 // pred_check
      _
    $region15: #{tpu_custom_call.1} parent=1 // pred_check_branch
      %27 = sbr.rel (0) target = $region17
    $region16: #{tpu_custom_call.1} parent=1 // pred_region
      _
    $region17: #{tpu_custom_call.1} parent=1 // pred_fallthru
      _
    // Predicated region
    $region18: #{tpu_custom_call.1} parent=1 // pred_check
      _
    $region19: #{tpu_custom_call.1} parent=1 // pred_check_branch
      %29 = sbr.rel (0) target = $region21
    $region20: #{tpu_custom_call.1} parent=1 // pred_region
      %s31 = ssub.s32 256, 256
      %32 = vsyncadd [#allocation3], %s31
      %s33 = sshll.u32 [#allocation2], 4
      %s34 = int_to_ptr.vmem [resolvable:$true] %s33
      %39 = dma.hbm_to_vmem [thread:$0]  %s4, 256, %s34, [#allocation3], 64, 64, 4
    $region21: #{tpu_custom_call.1} parent=1 // pred_fallthru
      _
    // Predicated region
    $region22: #{tpu_custom_call.1} parent=1 // pred_check
      _
    $region23: #{tpu_custom_call.1} parent=1 // pred_check_branch
      %41 = sbr.rel (0) target = $region25
    $region24: #{tpu_custom_call.1} parent=1 // pred_region
      _
    $region25: #{tpu_custom_call.1} parent=1 // pred_fallthru
      _
    // Predicated region
    $region26: #{tpu_custom_call.1} parent=1 // pred_check
      _
    $region27: #{tpu_custom_call.1} parent=1 // pred_check_branch
      %43 = sbr.rel (0) target = $region29
    $region28: #{tpu_custom_call.1} parent=1 // pred_region
      %s45 = ssub.s32 256, 256
      %46 = vsyncadd [#allocation6], %s45
      %s47 = sshll.u32 [#allocation5], 4
      %s48 = int_to_ptr.vmem [resolvable:$true] %s47
      %53 = dma.hbm_to_vmem [thread:$0]  %s6, 256, %s48, [#allocation6], 64, 64, 4
    $region29: #{tpu_custom_call.1} parent=1 // pred_fallthru
      _
    // Predicated region
    $region30: #{tpu_custom_call.1} parent=1 // pred_check
      _
    $region31: #{tpu_custom_call.1} parent=1 // pred_check_branch
      %55 = sbr.rel (0) target = $region33
    $region32: #{tpu_custom_call.1} parent=1 // pred_region
      _
    $region33: #{tpu_custom_call.1} parent=1 // pred_fallthru
      _
    // Predicated region
    $region34: #{tpu_custom_call.1} parent=1 // pred_check
      _
    $region35: #{tpu_custom_call.1} parent=1 // pred_check_branch
      %57 = sbr.rel (0) target = $region37
    $region36: #{tpu_custom_call.1} parent=1 // pred_region
      %58 = dma.done [#allocation3], 256
    $region37: #{tpu_custom_call.1} parent=1 // pred_fallthru
      _
    // Predicated region
    $region38: #{tpu_custom_call.1} parent=1 // pred_check
      _
    $region39: #{tpu_custom_call.1} parent=1 // pred_check_branch
      %60 = sbr.rel (0) target = $region41
    $region40: #{tpu_custom_call.1} parent=1 // pred_region
      %61 = dma.done [#allocation6], 256
    $region41: #{tpu_custom_call.1} parent=1 // pred_fallthru
      _
    %v63 = vld [vmem:[%s0] sm:$0x3]
    %v64 = vld [vmem:[%s1] sm:$0x3]
    %v65 = vld [vmem:[%s2] sm:$0x3]
    %v66 = vld [vmem:[%s3] sm:$0x1]
    %68 = vset.pattern.permute.xlu0 0
    %69 = vperm.xlu0 %68, %v63
    %v70 = vpop.permute.xlu0 %69
    %v73 = vlaneseq
    %v74 = vshrl.u32 %v73, 7
    %v75 = vsub.s32 0, %v74
    %v76 = vrot.slane %v66, %v75
    %v78 = vmul.f32 %v70, %v76
    %v79 = vpack.c.bf16 %v64, %v64
    %v80 = vld [vmem:[#allocation2] sm:$0xf]
    %v81 = vld [vmem:[#allocation2 + $0x4] sm:$0xf]
    %v82 = vld [vmem:[#allocation2 + $0x8] sm:$0xf]
    %v83 = vld [vmem:[#allocation2 + $0xc] sm:$0xf]
    %v88 = vunpack.c.l.b16 %v80
    %v89 = vunpack.c.l.b16 %v81
    %v90 = vunpack.c.l.b16 %v82
    %v91 = vunpack.c.l.b16 %v83
    %v92 = vpack.c.b16 %v89, %v88
    %v93 = vpack.c.b16 %v91, %v90
    %vm96 = vcmask 261120
    %v98 = vsel %vm96, %v79, 0
    %100 = vmatprep.subr.bf16.mxu0 0
    %101 = vmatpush1.bf16.msra.mxu0 0
    %102 = vmatprep.subr.bf16.mxu0 0
    %103 = vmatpush1.bf16.msra.mxu0 0
    %104 = vmatprep.subr.bf16.mxu0 0
    %105 = vmatpush1.bf16.msra.mxu0 0
    %106 = vmatprep.subr.bf16.mxu0 0
    %107 = vmatpush1.bf16.msra.mxu0 0
    %108 = vmatprep.subr.bf16.mxu0 0
    %109 = vmatpush1.bf16.msra.mxu0 0
    %110 = vmatprep.subr.bf16.mxu0 0
    %111 = vmatpush1.bf16.msra.mxu0 0
    %112 = vmatprep.subr.bf16.mxu0 0
    %113 = vmatpush1.bf16.msra.mxu0 %v93
    %114 = vmatprep.subr.bf16.mxu0 0
    %115 = vmatpush1.bf16.msra.mxu0 %v92
    %116 = vmatprep.subr.bf16.mxu0 0
    %117 = vmatpush2.bf16.msra.mxu0 0
    %118 = vmatprep.subr.bf16.mxu0 0
    %119 = vmatpush2.bf16.msra.mxu0 0
    %120 = vmatprep.subr.bf16.mxu0 0
    %121 = vmatpush2.bf16.msra.mxu0 0
    %122 = vmatprep.subr.bf16.mxu0 0
    %123 = vmatpush2.bf16.msra.mxu0 0
    %124 = vmatprep.subr.bf16.mxu0 0
    %125 = vmatpush2.bf16.msra.mxu0 0
    %126 = vmatprep.subr.bf16.mxu0 0
    %127 = vmatpush2.bf16.msra.mxu0 0
    %128 = vmatprep.subr.bf16.mxu0 0
    %129 = vmatpush2.bf16.msra.mxu0 0
    %130 = vmatprep.subr.bf16.mxu0 0
    %131 = vmatpush2.bf16.msra.mxu0 0
    %132 = vmatprep.mubr.bf16.mxu0 0
    %133 = vmatmul.mubr.bf16.gmra.mxu0 %v98
    %v134 = vpop.f32.mrf.mxu0
    %v135 = vadd.f32 0.0, %v134
    %v136 = vpop.f32.mrf.mxu0
    %v137 = vpop.f32.mrf.mxu0
    %v138 = vpop.f32.mrf.mxu0
    %139 = vdwg.mxu0
    %v140 = vadd.f32 %v78, %v135
    %v141 = vld [vmem:[%s5] sm:$0x1]
    %v143 = vlaneseq
    %v144 = vshrl.u32 %v143, 7
    %v145 = vsub.s32 0, %v144
    %v146 = vrot.slane %v141, %v145
    %v148 = vadd.f32 %v140, %v146
    %v149 = vxor.u32 %v148, 2147483648
    %v150 = vmul.f32 %v149, 1.442695
    %v151 = vpow.pop %v150
    %v152 = vadd.f32 %v151, 1.0
    %v153 = vrcp.pop %v152
    %v154 = vmul.f32 1.0, %v153
    %v155 = vtanh.pop %v148
    %157 = vrot.lane.b32.xlu0 %v65, 32
    %v158 = vpop.permute.xlu0 %157
    %v160 = vmul.f32 %v154, %v158
    %162 = vrot.lane.b32.xlu0 %v155, 32
    %v163 = vpop.permute.xlu0 %162
    %v165 = vmul.f32 %v154, %v163
    %167 = vrot.lane.b32.xlu0 %v165, 32
    %v168 = vpop.permute.xlu0 %167
    %v170 = vadd.f32 %v160, %v168
    %v171 = vtanh.pop %v170
    %173 = vrot.lane.b32.xlu0 %v171, 32
    %v174 = vpop.permute.xlu0 %173
    %v176 = vmul.f32 %v154, %v174
    %178 = vrot.lane.b32.xlu0 %v176, 64
    %v179 = vpop.permute.xlu0 %178
    %vm181 = vcmask 254976
    %182 = vst.msk [vmem:[#allocation8] sm:$0x3] %vm181, %v179
    %184 = vrot.lane.b32.xlu0 %v170, 96
    %v185 = vpop.permute.xlu0 %184
    %187 = vst.msk [vmem:[#allocation10] sm:$0x3] %vm181, %v185
    %v188 = vpack.c.bf16 %v176, %v176
    %v189 = vld [vmem:[#allocation5] sm:$0xf]
    %v190 = vld [vmem:[#allocation5 + $0x4] sm:$0xf]
    %v191 = vld [vmem:[#allocation5 + $0x8] sm:$0xf]
    %v192 = vld [vmem:[#allocation5 + $0xc] sm:$0xf]
    %v193 = vld [vmem:[%s7] sm:$0x1]
    %v195 = vlaneseq
    %v196 = vshrl.u32 %v195, 7
    %v197 = vsub.s32 0, %v196
    %v198 = vrot.slane %v193, %v197
    %201 = vrot.lane.b32.xlu0 %v188, 64
    %v202 = vpop.permute.xlu0 %201
    %v207 = vunpack.c.l.b16 %v189
    %v208 = vunpack.c.l.b16 %v190
    %v209 = vunpack.c.l.b16 %v191
    %v210 = vunpack.c.l.b16 %v192
    %v211 = vpack.c.b16 %v208, %v207
    %v212 = vpack.c.b16 %v210, %v209
    %v216 = vsel %vm96, %v202, 0
    %218 = vmatprep.subr.bf16.mxu0 0
    %219 = vmatpush1.bf16.msra.mxu0 0
    %220 = vmatprep.subr.bf16.mxu0 0
    %221 = vmatpush1.bf16.msra.mxu0 0
    %222 = vmatprep.subr.bf16.mxu0 0
    %223 = vmatpush1.bf16.msra.mxu0 0
    %224 = vmatprep.subr.bf16.mxu0 0
    %225 = vmatpush1.bf16.msra.mxu0 0
    %226 = vmatprep.subr.bf16.mxu0 0
    %227 = vmatpush1.bf16.msra.mxu0 0
    %228 = vmatprep.subr.bf16.mxu0 0
    %229 = vmatpush1.bf16.msra.mxu0 0
    %230 = vmatprep.subr.bf16.mxu0 0
    %231 = vmatpush1.bf16.msra.mxu0 %v212
    %232 = vmatprep.subr.bf16.mxu0 0
    %233 = vmatpush1.bf16.msra.mxu0 %v211
    %234 = vmatprep.subr.bf16.mxu0 0
    %235 = vmatpush2.bf16.msra.mxu0 0
    %236 = vmatprep.subr.bf16.mxu0 0
    %237 = vmatpush2.bf16.msra.mxu0 0
    %238 = vmatprep.subr.bf16.mxu0 0
    %239 = vmatpush2.bf16.msra.mxu0 0
    %240 = vmatprep.subr.bf16.mxu0 0
    %241 = vmatpush2.bf16.msra.mxu0 0
    %242 = vmatprep.subr.bf16.mxu0 0
    %243 = vmatpush2.bf16.msra.mxu0 0
    %244 = vmatprep.subr.bf16.mxu0 0
    %245 = vmatpush2.bf16.msra.mxu0 0
    %246 = vmatprep.subr.bf16.mxu0 0
    %247 = vmatpush2.bf16.msra.mxu0 0
    %248 = vmatprep.subr.bf16.mxu0 0
    %249 = vmatpush2.bf16.msra.mxu0 0
    %250 = vmatprep.mubr.bf16.mxu0 0
    %251 = vmatmul.mubr.bf16.gmra.mxu0 %v216
    %v252 = vpop.f32.mrf.mxu0
    %v253 = vadd.f32 %v198, %v252
    %v254 = vpop.f32.mrf.mxu0
    %v255 = vpop.f32.mrf.mxu0
    %v256 = vpop.f32.mrf.mxu0
    %257 = vdwg.mxu0
    %vm258 = vcmask 320512
    %259 = vst.msk [vmem:[#allocation7] sm:$0x3] %vm258, %v253
    // Predicated region
    $region42: #{tpu_custom_call.1} parent=1 // pred_check
      _
    $region43: #{tpu_custom_call.1} parent=1 // pred_check_branch
      %261 = sbr.rel (0) target = $region45
    $region44: #{tpu_custom_call.1} parent=1 // pred_region
      %s263 = ssub.s32 32, 32
      %264 = vsyncadd [#allocation4], %s263
      %s266 = sshll.u32 [#allocation7], 4
      %s267 = int_to_ptr.vmem [resolvable:$true] %s266
      %269 = dma.vmem_to_hbm [thread:$0]  %s267, 32, %s8, [#allocation4]
    $region45: #{tpu_custom_call.1} parent=1 // pred_fallthru
      _
    // Predicated region
    $region46: #{tpu_custom_call.1} parent=1 // pred_check
      _
    $region47: #{tpu_custom_call.1} parent=1 // pred_check_branch
      %271 = sbr.rel (0) target = $region49
    $region48: #{tpu_custom_call.1} parent=1 // pred_region
      %s273 = ssub.s32 32, 32
      %274 = vsyncadd [#allocation9], %s273
      %s276 = sshll.u32 [#allocation8], 4
      %s277 = int_to_ptr.vmem [resolvable:$true] %s276
      %279 = dma.vmem_to_hbm [thread:$0]  %s277, 32, %s9, [#allocation9]
    $region49: #{tpu_custom_call.1} parent=1 // pred_fallthru
      _
    // Predicated region
    $region50: #{tpu_custom_call.1} parent=1 // pred_check
      _
    $region51: #{tpu_custom_call.1} parent=1 // pred_check_branch
      %281 = sbr.rel (0) target = $region53
    $region52: #{tpu_custom_call.1} parent=1 // pred_region
      %s283 = ssub.s32 32, 32
      %284 = vsyncadd [#allocation9], %s283
      %s286 = sshll.u32 [#allocation10], 4
      %s287 = int_to_ptr.vmem [resolvable:$true] %s286
      %289 = dma.vmem_to_hbm [thread:$0]  %s287, 32, %s10, [#allocation9]
    $region53: #{tpu_custom_call.1} parent=1 // pred_fallthru
      _
    // Predicated region
    $region54: #{tpu_custom_call.1} parent=1 // pred_check
      _
    $region55: #{tpu_custom_call.1} parent=1 // pred_check_branch
      %291 = sbr.rel (0) target = $region57
    $region56: #{tpu_custom_call.1} parent=1 // pred_region
      %292 = dma.done [#allocation4], 32
    $region57: #{tpu_custom_call.1} parent=1 // pred_fallthru
      _
    // Predicated region
    $region58: #{tpu_custom_call.1} parent=1 // pred_check
      _
    $region59: #{tpu_custom_call.1} parent=1 // pred_check_branch
      %294 = sbr.rel (0) target = $region61
    $region60: #{tpu_custom_call.1} parent=1 // pred_region
      %295 = dma.done [#allocation9], 32
    $region61: #{tpu_custom_call.1} parent=1 // pred_fallthru
      _
    // Predicated region
    $region62: #{tpu_custom_call.1} parent=1 // pred_check
      _
    $region63: #{tpu_custom_call.1} parent=1 // pred_check_branch
      %297 = sbr.rel (0) target = $region65
    $region64: #{tpu_custom_call.1} parent=1 // pred_region
      %298 = dma.done [#allocation9], 32
    $region65: #{tpu_custom_call.1} parent=1 // pred_fallthru
      _
    %299 = vsyncpa [#allocation3], 1
    %300 = vsyncpa [#allocation6], 1
    %301 = vsyncpa [#allocation4], 1
    %302 = vsyncpa [#allocation9], 1

</llo_original>
